<compile_context>
chip_gen: v6e
topology: v6e:2x2x1
jax: 0.10.0
libtpu: 0.0.40
codegen_flags: <defaults>
</compile_context>

<pallas_src>
import jax
import jax.numpy as jnp
from jax.experimental import pallas as pl
from jax.experimental.pallas import tpu as pltpu


def _floor_kernel(x_ref, o_ref):
    o_ref[...] = jnp.floor(x_ref[...])


def _sublane_for(dtype):
    # Minimum sublane tiling per element width (f32 -> 8, bf16/f16 -> 16, 8-bit -> 32).
    return {4: 8, 2: 16, 1: 32}.get(jnp.dtype(dtype).itemsize, 8)


def floor_inplace(x):
    """Pallas TPU equivalent of torch.floor_(x); returns the floored array."""
    orig_shape = x.shape
    dtype = x.dtype

    # torch.floor_ on integral dtypes is the identity; skip the kernel entirely.
    if not jnp.issubdtype(dtype, jnp.floating):
        return x

    n = x.size
    itemsize = jnp.dtype(dtype).itemsize
    sub = _sublane_for(dtype)

    # Widest lane-dense slab (multiple of 128) that tiles n exactly with >= sub rows.
    lane = 128
    for cand in (1024, 512, 256, 128):
        if n % (sub * cand) == 0 and (n // cand) >= sub:
            lane = cand
            break

    tile_elems = sub * lane
    pad = (-n) % tile_elems

    x_flat = x.reshape(-1)  # reshape-only (no copy) in the no-pad case
    if pad:
        x_flat = jnp.pad(x_flat, (0, pad))
    rows = (n + pad) // lane
    x2d = x_flat.reshape(rows, lane)

    # Block sizing: target ~1 MiB per block, rounded to the dtype sublane multiple.
    target_rows = max(sub, ((1 << 20) // (lane * itemsize)) // sub * sub)
    block_rows = min(rows, target_rows)

    if block_rows == rows:
        # Small input: single whole-array block, no grid / pipeline machinery.
        out2d = pl.pallas_call(
            _floor_kernel,
            out_shape=jax.ShapeDtypeStruct((rows, lane), dtype),
        )(x2d)
    else:
        grid = (pl.cdiv(rows, block_rows),)
        out2d = pl.pallas_call(
            _floor_kernel,
            out_shape=jax.ShapeDtypeStruct((rows, lane), dtype),
            grid=grid,
            in_specs=[pl.BlockSpec((block_rows, lane), lambda i: (i, 0))],
            out_specs=pl.BlockSpec((block_rows, lane), lambda i: (i, 0)),
            compiler_params=pltpu.CompilerParams(
                dimension_semantics=("parallel",),
                # Explicit cap: ~1 MiB block * 2 buffers * (in + out) << 32 MiB,
                # safe on v7x's smaller scoped VMEM as well as v5e/v6e.
                vmem_limit_bytes=32 * 1024 * 1024,
            ),
        )(x2d)

    if pad:
        out = out2d.reshape(-1)[:n].reshape(orig_shape)
    else:
        out = out2d.reshape(orig_shape)
    return out


if __name__ == "__main__":
    key = jax.random.PRNGKey(0)
    # Shape consistent with the PyTorch test's NCHW input.
    x = jax.random.uniform(
        key, (2, 4, 16, 16), dtype=jnp.float32, minval=-10.0, maxval=10.0
    )

    y = floor_inplace(x)
    y = jax.block_until_ready(y)

    expected = jnp.floor(x)
    assert y.shape == x.shape
    assert y.dtype == x.dtype
    assert bool(jnp.all(y == expected))

    print("KERNEL_OK")
</pallas_src>

<mosaic_0001>
module attributes {stable_mosaic.version = 11 : i64} {
  func.func @_floor_kernel(%arg0: memref<8x256xf32, #tpu.memory_space<vmem>>, %arg1: memref<8x256xf32, #tpu.memory_space<vmem>>) attributes {dimension_semantics = [], scalar_prefetch = 0 : i64, scratch_operands = 0 : i64, tpu.core_type = #tpu.core_type<tc>} {
    %c0 = arith.constant 0 : index
    %c0_0 = arith.constant 0 : index
    %0 = vector.load %arg0[%c0, %c0_0] : memref<8x256xf32, #tpu.memory_space<vmem>>, vector<8x256xf32>
    %1 = math.floor %0 : vector<8x256xf32>
    %c0_1 = arith.constant 0 : index
    %c0_2 = arith.constant 0 : index
    %2 = vector.load %arg1[%c0_1, %c0_2] : memref<8x256xf32, #tpu.memory_space<vmem>>, vector<8x256xf32>
    tpu.vector_store %arg1[%c0_1, %c0_2], %1 {strides = array<i32>} : memref<8x256xf32, #tpu.memory_space<vmem>>, vector<8x256xf32>,
    return
  }
}

</mosaic_0001>

<llo_original>
// kernel: tpu_custom_call.1
$region0: #{tpu_custom_call.1}
  #allocation0 [shape = 'u32[]', space=smem, size = 0x4, offset = 0x4, fixed_abs, tag = 'smem constant byte address 0x4 - core index']
  #allocation1 [shape = 'u32[144,128]{1,0:T(1,128)}', space=vmem, size = 0x12000, scoped, tag = 'internal scratch']
  %s0 = inlined_call_operand.hbm [shape: f32[8,256], index: 0, kind: input, shape index: {}]
  %s1 = inlined_call_operand.hbm [shape: f32[8,256], index: 1, kind: output, shape index: {}]
  %s2 = sld [smem:[#allocation0]]
  $region18: #{tpu_custom_call.1} parent=0
    _
  %s4 = ssub.s32 1, %s2
  %s5 = scalar_select 0, %s4, %s2
  $region1: #{tpu_custom_call.1} parent=0
    #allocation2 [shape = 'u8[8192]{0}', space=vmem, size = 0x2000, scoped, tag = 'input window, operand 0, single buffered']
    #allocation3 [shape = 's32[1]{0}', space=sflag, size = 0x4, scoped, tag = 'scoped memory for tpu_custom_call.1']
    #allocation4 [shape = 's32[1]{0}', space=sflag, size = 0x4, scoped, tag = 'scoped memory for tpu_custom_call.1']
    #allocation5 [shape = 'u8[8192]{0}', space=vmem, size = 0x2000, scoped, tag = 'output window, operand 0, single buffered']
    %6 = vsyncpa [#allocation3], 0
    %7 = vsyncpa [#allocation4], 0
    // Predicated region
    $region2: #{tpu_custom_call.1} parent=1 // pred_check
      _
    $region3: #{tpu_custom_call.1} parent=1 // pred_check_branch
      %9 = sbr.rel (0) target = $region5
    $region4: #{tpu_custom_call.1} parent=1 // pred_region
      %s11 = ssub.s32 256, 256
      %12 = vsyncadd [#allocation3], %s11
      %s14 = sshll.u32 [#allocation2], 4
      %s15 = int_to_ptr.vmem [resolvable:$true] %s14
      %17 = dma.hbm_to_vmem [thread:$0]  %s0, 256, %s15, [#allocation3]
    $region5: #{tpu_custom_call.1} parent=1 // pred_fallthru
      _
    // Predicated region
    $region6: #{tpu_custom_call.1} parent=1 // pred_check
      _
    $region7: #{tpu_custom_call.1} parent=1 // pred_check_branch
      %19 = sbr.rel (0) target = $region9
    $region8: #{tpu_custom_call.1} parent=1 // pred_region
      %20 = dma.done [#allocation3], 256
    $region9: #{tpu_custom_call.1} parent=1 // pred_fallthru
      _
    %v21 = vld [vmem:[#allocation2] sm:$0xff]
    %v22 = vld [vmem:[#allocation2 + $0x8] sm:$0xff]
    %v23 = vfloor.f32 %v21
    %v24 = vfloor.f32 %v22
    %25 = vst [vmem:[#allocation5] sm:$0xff] %v23
    %26 = vst [vmem:[#allocation5 + $0x8] sm:$0xff] %v24
    // Predicated region
    $region10: #{tpu_custom_call.1} parent=1 // pred_check
      _
    $region11: #{tpu_custom_call.1} parent=1 // pred_check_branch
      %28 = sbr.rel (0) target = $region13
    $region12: #{tpu_custom_call.1} parent=1 // pred_region
      %s30 = ssub.s32 256, 256
      %31 = vsyncadd [#allocation4], %s30
      %s33 = sshll.u32 [#allocation5], 4
      %s34 = int_to_ptr.vmem [resolvable:$true] %s33
      %36 = dma.vmem_to_hbm [thread:$0]  %s34, 256, %s1, [#allocation4]
    $region13: #{tpu_custom_call.1} parent=1 // pred_fallthru
      _
    // Predicated region
    $region14: #{tpu_custom_call.1} parent=1 // pred_check
      _
    $region15: #{tpu_custom_call.1} parent=1 // pred_check_branch
      %38 = sbr.rel (0) target = $region17
    $region16: #{tpu_custom_call.1} parent=1 // pred_region
      %39 = dma.done [#allocation4], 256
    $region17: #{tpu_custom_call.1} parent=1 // pred_fallthru
      _
    %40 = vsyncpa [#allocation3], 1
    %41 = vsyncpa [#allocation4], 1

</llo_original>
